<compile_context>
chip_gen: v5e
topology: v5e:2x2
jax: 0.10.0
libtpu: 0.0.40
codegen_flags: <defaults>
</compile_context>

<pallas_src>
import math

import numpy as np
import jax
import jax.numpy as jnp
from jax import lax
from jax.experimental import pallas as pl
from jax.experimental.pallas import tpu as pltpu

# ----------------------- model dims (small, consistent w/ module) ------------
B = 2          # batch
S = 8          # sequence length
H = 32         # hidden_dim
NH = 4         # num_heads
HD = H // NH   # head_dim
FF = 64        # ff_dim
EPS = 1e-5     # nn.LayerNorm default eps

BS = B * S                 # 16 token rows total
NR = NH * S                # 32 (head-replica, seq) rows per batch
INV_SQRT_HD = 1.0 / math.sqrt(HD)

# Constant masks (trace-time numpy, passed as VMEM inputs):
#   KQ_MASK[r, c]    = 1  iff replica-head (r // S) == lane-head (c // HD)
#                      -> turns concat([k]*NH) / concat([v]*NH) into block-diagonal
#                         per-head key/value operands.
#   GROUP_MASK[r, r'] = 1 iff score columns r, r' belong to the same head group
#                      -> one matmul computes + broadcasts the softmax denominator.
_row_head = np.arange(NR) // S
KQ_MASK_NP = (_row_head[:, None] == (np.arange(H) // HD)[None, :]).astype(np.float32)
GROUP_MASK_NP = (_row_head[:, None] == _row_head[None, :]).astype(np.float32)


def _layernorm(h, gamma, beta):
    mu = jnp.mean(h, axis=-1, keepdims=True)
    d = h - mu
    var = jnp.mean(d * d, axis=-1, keepdims=True)
    return d * lax.rsqrt(var + EPS) * gamma + beta


def encoder_layer_kernel(x_ref, wqkv_ref, wo_ref, w1_ref, w2_ref, p_ref,
                         kq_mask_ref, grp_mask_ref, out_ref):
    """One grid step == one batch element, fully resident in VMEM.

    x_ref        : (S, H)        token rows of this batch
    wqkv_ref     : (H, 3H)       [Wq | Wk | Wv]
    wo_ref       : (H, H)
    w1_ref       : (H, FF)
    w2_ref       : (FF, H)
    p_ref        : (8, 128)      packed biases + LayerNorm affine params (one vreg)
    kq_mask_ref  : (NH*S, H)     0/1 head block mask (keys/values)
    grp_mask_ref : (NH*S, NH*S)  0/1 same-head-group mask (softmax denominator)
    out_ref      : (S, H)
    """
    x = x_ref[...]                          # (8, 32)
    pvec = p_ref[...]                       # (8, 128)
    kq_mask = kq_mask_ref[...]              # (32, 32)
    grp_mask = grp_mask_ref[...]            # (32, 32)

    bqkv = pvec[0:1, 0:3 * H]               # (1, 96)
    b1 = pvec[1:2, 0:FF]                    # (1, 64)
    bo = pvec[2:3, 0:H]
    b2 = pvec[3:4, 0:H]
    g1 = pvec[4:5, 0:H]
    be1 = pvec[5:6, 0:H]
    g2 = pvec[6:7, 0:H]
    be2 = pvec[7:8, 0:H]

    # ---- fused Q/K/V projection: one MXU matmul ----
    qkv = jnp.dot(x, wqkv_ref[...], preferred_element_type=jnp.float32) + bqkv   # (8, 96)
    q = qkv[:, 0:H]                         # (8, 32)   heads stay in lanes
    k = qkv[:, H:2 * H]                     # (8, 32)
    v = qkv[:, 2 * H:3 * H]                 # (8, 32)

    # ---- all heads at once, no head repack ----
    # Replicate k/v along sublanes (one per head) and mask to block-diagonal so a
    # single matmul contracts each head only against its own HD lanes.
    k_bd = jnp.concatenate([k, k, k, k], axis=0) * kq_mask      # (32, 32)
    v_bd = jnp.concatenate([v, v, v, v], axis=0) * kq_mask      # (32, 32)

    # scores[s, h*S + j] = <q[s, head h], k[j, head h]> / sqrt(HD)
    scores = lax.dot_general(q, k_bd, (((1,), (1,)), ((), ())),
                             preferred_element_type=jnp.float32) * INV_SQRT_HD   # (8, 32)

    # per-head softmax: a per-row max shift is constant within every head group,
    # the group sums are computed + broadcast with one block-diagonal matmul.
    m = jnp.max(scores, axis=-1, keepdims=True)
    e = jnp.exp(scores - m)                                                      # (8, 32)
    denom = jnp.dot(e, grp_mask, preferred_element_type=jnp.float32)             # (8, 32)
    p = e / denom                                                                # exact division

    # context lands directly back in the heads-in-lanes (S, H) layout.
    ctx = jnp.dot(p, v_bd, preferred_element_type=jnp.float32)                   # (8, 32)

    attn_out = jnp.dot(ctx, wo_ref[...], preferred_element_type=jnp.float32) + bo

    # ---- residual + LayerNorm 1 ----
    h1 = _layernorm(x + attn_out, g1, be1)

    # ---- feed-forward: Linear -> ReLU -> Linear (dropout = identity) ----
    ff = jnp.dot(h1, w1_ref[...], preferred_element_type=jnp.float32) + b1
    ff = jnp.maximum(ff, 0.0)
    ff = jnp.dot(ff, w2_ref[...], preferred_element_type=jnp.float32) + b2

    # ---- residual + LayerNorm 2 ----
    out_ref[...] = _layernorm(h1 + ff, g2, be2).astype(out_ref.dtype)


# ------------------------------ host-side packing ------------------------------
def pack_params(p):
    """Pack params into lane-aligned refs (each weight block starts at lane 0)."""
    wqkv = jnp.concatenate([p["wq"], p["wk"], p["wv"]], axis=1)      # (32, 96)
    pvec = jnp.zeros((8, 128), jnp.float32)
    pvec = pvec.at[0, 0:3 * H].set(jnp.concatenate([p["bq"][0], p["bk"][0], p["bv"][0]]))
    pvec = pvec.at[1, 0:FF].set(p["b1"][0])
    pvec = pvec.at[2, 0:H].set(p["bo"][0])
    pvec = pvec.at[3, 0:H].set(p["b2"][0])
    pvec = pvec.at[4, 0:H].set(p["g1"][0])
    pvec = pvec.at[5, 0:H].set(p["be1"][0])
    pvec = pvec.at[6, 0:H].set(p["g2"][0])
    pvec = pvec.at[7, 0:H].set(p["be2"][0])
    return wqkv, p["wo"], p["w1"], p["w2"], pvec


def encoder_layer(x, params):
    """x: (B, S, H) float32.  Grid over batch; weights resident across steps."""
    wqkv, wo, w1, w2, pvec = pack_params(params)
    x2d = x.reshape(BS, H)
    kq_mask = jnp.asarray(KQ_MASK_NP)
    grp_mask = jnp.asarray(GROUP_MASK_NP)

    out2d = pl.pallas_call(
        encoder_layer_kernel,
        out_shape=jax.ShapeDtypeStruct((BS, H), x.dtype),
        grid=(B,),
        in_specs=[
            pl.BlockSpec((S, H), lambda b: (b, 0)),        # x: one batch per step
            pl.BlockSpec((H, 3 * H), lambda b: (0, 0)),    # Wqkv
            pl.BlockSpec((H, H), lambda b: (0, 0)),        # Wo
            pl.BlockSpec((H, FF), lambda b: (0, 0)),       # W1
            pl.BlockSpec((FF, H), lambda b: (0, 0)),       # W2
            pl.BlockSpec((8, 128), lambda b: (0, 0)),      # packed biases / LN params
            pl.BlockSpec((NR, H), lambda b: (0, 0)),       # kq/v head block mask
            pl.BlockSpec((NR, NR), lambda b: (0, 0)),      # softmax group mask
        ],
        out_specs=pl.BlockSpec((S, H), lambda b: (b, 0)),
        compiler_params=pltpu.CompilerParams(dimension_semantics=("parallel",)),
    )(x2d, wqkv, wo, w1, w2, pvec, kq_mask, grp_mask)
    return out2d.reshape(B, S, H)


# ------------------------------ parameter init --------------------------------
def init_params(key):
    ks = jax.random.split(key, 12)

    def lin(k, fan_in, fan_out):
        # Kaiming-uniform-ish deterministic init, stored as (in, out) for x @ W.
        bound = 1.0 / math.sqrt(fan_in)
        kw, kb = jax.random.split(k)
        w = jax.random.uniform(kw, (fan_in, fan_out), jnp.float32, -bound, bound)
        b = jax.random.uniform(kb, (1, fan_out), jnp.float32, -bound, bound)
        return w, b

    wq, bq = lin(ks[0], H, H)
    wk, bk = lin(ks[1], H, H)
    wv, bv = lin(ks[2], H, H)
    wo, bo = lin(ks[3], H, H)
    w1, b1 = lin(ks[4], H, FF)
    w2, b2 = lin(ks[5], FF, H)
    return dict(
        wq=wq, bq=bq, wk=wk, bk=bk, wv=wv, bv=bv, wo=wo, bo=bo,
        w1=w1, b1=b1, w2=w2, b2=b2,
        g1=jnp.ones((1, H), jnp.float32), be1=jnp.zeros((1, H), jnp.float32),
        g2=jnp.ones((1, H), jnp.float32), be2=jnp.zeros((1, H), jnp.float32),
    )


# ------------------------------ pure-JAX reference -----------------------------
def encoder_layer_ref(x, p):
    q = x @ p["wq"] + p["bq"]
    k = x @ p["wk"] + p["bk"]
    v = x @ p["wv"] + p["bv"]
    qh = q.reshape(B, S, NH, HD).transpose(0, 2, 1, 3)
    kh = k.reshape(B, S, NH, HD).transpose(0, 2, 1, 3)
    vh = v.reshape(B, S, NH, HD).transpose(0, 2, 1, 3)
    scores = jnp.einsum("bnqd,bnkd->bnqk", qh, kh) / math.sqrt(HD)
    attn = jax.nn.softmax(scores, axis=-1)
    ctx = jnp.einsum("bnqk,bnkd->bnqd", attn, vh).transpose(0, 2, 1, 3).reshape(B, S, H)
    attn_out = ctx @ p["wo"] + p["bo"]

    def ln(h, g, b):
        mu = h.mean(-1, keepdims=True)
        var = ((h - mu) ** 2).mean(-1, keepdims=True)
        return (h - mu) / jnp.sqrt(var + EPS) * g + b

    h1 = ln(x + attn_out, p["g1"], p["be1"])
    ff = jnp.maximum(h1 @ p["w1"] + p["b1"], 0.0) @ p["w2"] + p["b2"]
    return ln(h1 + ff, p["g2"], p["be2"])


if __name__ == "__main__":
    key = jax.random.PRNGKey(0)
    kx, kp = jax.random.split(key)
    x = jax.random.normal(kx, (B, S, H), jnp.float32)
    params = init_params(kp)

    out = jax.block_until_ready(encoder_layer(x, params))
    with jax.default_matmul_precision("float32"):
        ref = encoder_layer_ref(x, params)

    assert out.shape == (B, S, H)
    err = jnp.max(jnp.abs(out - ref))
    assert jnp.allclose(out, ref, atol=2e-3, rtol=2e-3), f"max err {err}"
    print("KERNEL_OK")
</pallas_src>

<mosaic_0001>
module attributes {stable_mosaic.version = 11 : i64} {
  func.func @encoder_layer_kernel(%arg0: i32, %arg1: memref<8x32xf32, #tpu.memory_space<vmem>>, %arg2: memref<32x96xf32, #tpu.memory_space<vmem>>, %arg3: memref<32x32xf32, #tpu.memory_space<vmem>>, %arg4: memref<32x64xf32, #tpu.memory_space<vmem>>, %arg5: memref<64x32xf32, #tpu.memory_space<vmem>>, %arg6: memref<8x128xf32, #tpu.memory_space<vmem>>, %arg7: memref<32x32xf32, #tpu.memory_space<vmem>>, %arg8: memref<32x32xf32, #tpu.memory_space<vmem>>, %arg9: memref<8x32xf32, #tpu.memory_space<vmem>>) attributes {dimension_semantics = [#tpu.dimension_semantics<parallel>], iteration_bounds = array<i64: 2>, scalar_prefetch = 0 : i64, scratch_operands = 0 : i64, tpu.core_type = #tpu.core_type<tc>, window_params = [{transform_indices = @transform_0, window_bounds = array<i64: 8, 32>}, {pipeline_mode = #tpu.pipeline_mode<synchronous>, transform_indices = @transform_1, window_bounds = array<i64: 32, 96>}, {pipeline_mode = #tpu.pipeline_mode<synchronous>, transform_indices = @transform_2, window_bounds = array<i64: 32, 32>}, {pipeline_mode = #tpu.pipeline_mode<synchronous>, transform_indices = @transform_3, window_bounds = array<i64: 32, 64>}, {pipeline_mode = #tpu.pipeline_mode<synchronous>, transform_indices = @transform_4, window_bounds = array<i64: 64, 32>}, {pipeline_mode = #tpu.pipeline_mode<synchronous>, transform_indices = @transform_5, window_bounds = array<i64: 8, 128>}, {pipeline_mode = #tpu.pipeline_mode<synchronous>, transform_indices = @transform_6, window_bounds = array<i64: 32, 32>}, {pipeline_mode = #tpu.pipeline_mode<synchronous>, transform_indices = @transform_7, window_bounds = array<i64: 32, 32>}, {transform_indices = @transform_8, window_bounds = array<i64: 8, 32>}]} {
    %c0 = arith.constant 0 : index
    %c0_0 = arith.constant 0 : index
    %0 = vector.load %arg1[%c0, %c0_0] : memref<8x32xf32, #tpu.memory_space<vmem>>, vector<8x32xf32>
    %c0_1 = arith.constant 0 : index
    %c0_2 = arith.constant 0 : index
    %1 = vector.load %arg6[%c0_1, %c0_2] : memref<8x128xf32, #tpu.memory_space<vmem>>, vector<8x128xf32>
    %c0_3 = arith.constant 0 : index
    %c0_4 = arith.constant 0 : index
    %2 = vector.load %arg7[%c0_3, %c0_4] : memref<32x32xf32, #tpu.memory_space<vmem>>, vector<32x32xf32>
    %c0_5 = arith.constant 0 : index
    %c0_6 = arith.constant 0 : index
    %3 = vector.load %arg8[%c0_5, %c0_6] : memref<32x32xf32, #tpu.memory_space<vmem>>, vector<32x32xf32>
    %4 = vector.extract_strided_slice %1 {offsets = [0, 0], sizes = [1, 96], strides = [1, 1]} : vector<8x128xf32> to vector<1x96xf32>
    %5 = vector.extract_strided_slice %1 {offsets = [1, 0], sizes = [1, 64], strides = [1, 1]} : vector<8x128xf32> to vector<1x64xf32>
    %6 = vector.extract_strided_slice %1 {offsets = [2, 0], sizes = [1, 32], strides = [1, 1]} : vector<8x128xf32> to vector<1x32xf32>
    %7 = vector.extract_strided_slice %1 {offsets = [3, 0], sizes = [1, 32], strides = [1, 1]} : vector<8x128xf32> to vector<1x32xf32>
    %8 = vector.extract_strided_slice %1 {offsets = [4, 0], sizes = [1, 32], strides = [1, 1]} : vector<8x128xf32> to vector<1x32xf32>
    %9 = vector.extract_strided_slice %1 {offsets = [5, 0], sizes = [1, 32], strides = [1, 1]} : vector<8x128xf32> to vector<1x32xf32>
    %10 = vector.extract_strided_slice %1 {offsets = [6, 0], sizes = [1, 32], strides = [1, 1]} : vector<8x128xf32> to vector<1x32xf32>
    %11 = vector.extract_strided_slice %1 {offsets = [7, 0], sizes = [1, 32], strides = [1, 1]} : vector<8x128xf32> to vector<1x32xf32>
    %c0_7 = arith.constant 0 : index
    %c0_8 = arith.constant 0 : index
    %12 = vector.load %arg2[%c0_7, %c0_8] : memref<32x96xf32, #tpu.memory_space<vmem>>, vector<32x96xf32>
    %cst = arith.constant dense<0.000000e+00> : vector<8x96xf32>
    %13 = tpu.matmul %0, %12, %cst {dimension_numbers = #tpu.dot_dimension_numbers<[1], [0], [0], [1], [0, 0, 1, 1], [], []>} : vector<8x32xf32>, vector<32x96xf32>, vector<8x96xf32> -> vector<8x96xf32>
    %14 = vector.broadcast %4 : vector<1x96xf32> to vector<8x96xf32>
    %15 = arith.addf %13, %14 : vector<8x96xf32>
    %16 = vector.extract_strided_slice %15 {offsets = [0, 0], sizes = [8, 32], strides = [1, 1]} : vector<8x96xf32> to vector<8x32xf32>
    %17 = vector.extract_strided_slice %15 {offsets = [0, 32], sizes = [8, 32], strides = [1, 1]} : vector<8x96xf32> to vector<8x32xf32>
    %18 = vector.extract_strided_slice %15 {offsets = [0, 64], sizes = [8, 32], strides = [1, 1]} : vector<8x96xf32> to vector<8x32xf32>
    %19 = tpu.concatenate %17, %17, %17, %17 in 0 : vector<8x32xf32>, vector<8x32xf32>, vector<8x32xf32>, vector<8x32xf32> -> vector<32x32xf32>
    %20 = arith.mulf %19, %2 : vector<32x32xf32>
    %21 = tpu.concatenate %18, %18, %18, %18 in 0 : vector<8x32xf32>, vector<8x32xf32>, vector<8x32xf32>, vector<8x32xf32> -> vector<32x32xf32>
    %22 = arith.mulf %21, %2 : vector<32x32xf32>
    %cst_9 = arith.constant dense<0.000000e+00> : vector<8x32xf32>
    %23 = tpu.matmul %16, %20, %cst_9 {dimension_numbers = #tpu.dot_dimension_numbers<[1], [1], [0], [0], [0, 0, 1, 0], [], []>} : vector<8x32xf32>, vector<32x32xf32>, vector<8x32xf32> -> vector<8x32xf32>
    %cst_10 = arith.constant 0.353553385 : f32
    %24 = vector.broadcast %cst_10 : f32 to vector<8x32xf32>
    %25 = arith.mulf %23, %24 : vector<8x32xf32>
    %cst_11 = arith.constant dense<0xFF800000> : vector<8xf32>
    %26 = vector.multi_reduction <maximumf>, %25, %cst_11 [1] : vector<8x32xf32> to vector<8xf32>
    %27 = vector.shape_cast %26 : vector<8xf32> to vector<8x1xf32>
    %28 = vector.broadcast %27 : vector<8x1xf32> to vector<8x32xf32>
    %29 = arith.subf %25, %28 : vector<8x32xf32>
    %30 = math.exp %29 : vector<8x32xf32>
    %cst_12 = arith.constant dense<0.000000e+00> : vector<8x32xf32>
    %31 = tpu.matmul %30, %3, %cst_12 {dimension_numbers = #tpu.dot_dimension_numbers<[1], [0], [0], [1], [0, 0, 1, 1], [], []>} : vector<8x32xf32>, vector<32x32xf32>, vector<8x32xf32> -> vector<8x32xf32>
    %32 = arith.divf %30, %31 : vector<8x32xf32>
    %cst_13 = arith.constant dense<0.000000e+00> : vector<8x32xf32>
    %33 = tpu.matmul %32, %22, %cst_13 {dimension_numbers = #tpu.dot_dimension_numbers<[1], [0], [0], [1], [0, 0, 1, 1], [], []>} : vector<8x32xf32>, vector<32x32xf32>, vector<8x32xf32> -> vector<8x32xf32>
    %c0_14 = arith.constant 0 : index
    %c0_15 = arith.constant 0 : index
    %34 = vector.load %arg3[%c0_14, %c0_15] : memref<32x32xf32, #tpu.memory_space<vmem>>, vector<32x32xf32>
    %cst_16 = arith.constant dense<0.000000e+00> : vector<8x32xf32>
    %35 = tpu.matmul %33, %34, %cst_16 {dimension_numbers = #tpu.dot_dimension_numbers<[1], [0], [0], [1], [0, 0, 1, 1], [], []>} : vector<8x32xf32>, vector<32x32xf32>, vector<8x32xf32> -> vector<8x32xf32>
    %36 = vector.broadcast %6 : vector<1x32xf32> to vector<8x32xf32>
    %37 = arith.addf %35, %36 : vector<8x32xf32>
    %38 = arith.addf %0, %37 : vector<8x32xf32>
    %cst_17 = arith.constant dense<0.000000e+00> : vector<8xf32>
    %39 = vector.multi_reduction <add>, %38, %cst_17 [1] : vector<8x32xf32> to vector<8xf32>
    %40 = vector.shape_cast %39 : vector<8xf32> to vector<8x1xf32>
    %cst_18 = arith.constant 3.200000e+01 : f32
    %41 = vector.broadcast %cst_18 : f32 to vector<8x1xf32>
    %42 = arith.divf %40, %41 : vector<8x1xf32>
    %43 = vector.broadcast %42 : vector<8x1xf32> to vector<8x32xf32>
    %44 = arith.subf %38, %43 : vector<8x32xf32>
    %45 = arith.mulf %44, %44 : vector<8x32xf32>
    %cst_19 = arith.constant dense<0.000000e+00> : vector<8xf32>
    %46 = vector.multi_reduction <add>, %45, %cst_19 [1] : vector<8x32xf32> to vector<8xf32>
    %47 = vector.shape_cast %46 : vector<8xf32> to vector<8x1xf32>
    %cst_20 = arith.constant 3.200000e+01 : f32
    %48 = vector.broadcast %cst_20 : f32 to vector<8x1xf32>
    %49 = arith.divf %47, %48 : vector<8x1xf32>
    %cst_21 = arith.constant 9.99999974E-6 : f32
    %50 = vector.broadcast %cst_21 : f32 to vector<8x1xf32>
    %51 = arith.addf %49, %50 : vector<8x1xf32>
    %52 = math.rsqrt %51 : vector<8x1xf32>
    %53 = vector.broadcast %52 : vector<8x1xf32> to vector<8x32xf32>
    %54 = arith.mulf %44, %53 : vector<8x32xf32>
    %55 = vector.broadcast %8 : vector<1x32xf32> to vector<8x32xf32>
    %56 = arith.mulf %54, %55 : vector<8x32xf32>
    %57 = vector.broadcast %9 : vector<1x32xf32> to vector<8x32xf32>
    %58 = arith.addf %56, %57 : vector<8x32xf32>
    %c0_22 = arith.constant 0 : index
    %c0_23 = arith.constant 0 : index
    %59 = vector.load %arg4[%c0_22, %c0_23] : memref<32x64xf32, #tpu.memory_space<vmem>>, vector<32x64xf32>
    %cst_24 = arith.constant dense<0.000000e+00> : vector<8x64xf32>
    %60 = tpu.matmul %58, %59, %cst_24 {dimension_numbers = #tpu.dot_dimension_numbers<[1], [0], [0], [1], [0, 0, 1, 1], [], []>} : vector<8x32xf32>, vector<32x64xf32>, vector<8x64xf32> -> vector<8x64xf32>
    %61 = vector.broadcast %5 : vector<1x64xf32> to vector<8x64xf32>
    %62 = arith.addf %60, %61 : vector<8x64xf32>
    %cst_25 = arith.constant 0.000000e+00 : f32
    %63 = vector.broadcast %cst_25 : f32 to vector<8x64xf32>
    %64 = arith.maximumf %62, %63 : vector<8x64xf32>
    %c0_26 = arith.constant 0 : index
    %c0_27 = arith.constant 0 : index
    %65 = vector.load %arg5[%c0_26, %c0_27] : memref<64x32xf32, #tpu.memory_space<vmem>>, vector<64x32xf32>
    %cst_28 = arith.constant dense<0.000000e+00> : vector<8x32xf32>
    %66 = tpu.matmul %64, %65, %cst_28 {dimension_numbers = #tpu.dot_dimension_numbers<[1], [0], [0], [1], [0, 0, 1, 1], [], []>} : vector<8x64xf32>, vector<64x32xf32>, vector<8x32xf32> -> vector<8x32xf32>
    %67 = vector.broadcast %7 : vector<1x32xf32> to vector<8x32xf32>
    %68 = arith.addf %66, %67 : vector<8x32xf32>
    %69 = arith.addf %58, %68 : vector<8x32xf32>
    %cst_29 = arith.constant dense<0.000000e+00> : vector<8xf32>
    %70 = vector.multi_reduction <add>, %69, %cst_29 [1] : vector<8x32xf32> to vector<8xf32>
    %71 = vector.shape_cast %70 : vector<8xf32> to vector<8x1xf32>
    %cst_30 = arith.constant 3.200000e+01 : f32
    %72 = vector.broadcast %cst_30 : f32 to vector<8x1xf32>
    %73 = arith.divf %71, %72 : vector<8x1xf32>
    %74 = vector.broadcast %73 : vector<8x1xf32> to vector<8x32xf32>
    %75 = arith.subf %69, %74 : vector<8x32xf32>
    %76 = arith.mulf %75, %75 : vector<8x32xf32>
    %cst_31 = arith.constant dense<0.000000e+00> : vector<8xf32>
    %77 = vector.multi_reduction <add>, %76, %cst_31 [1] : vector<8x32xf32> to vector<8xf32>
    %78 = vector.shape_cast %77 : vector<8xf32> to vector<8x1xf32>
    %cst_32 = arith.constant 3.200000e+01 : f32
    %79 = vector.broadcast %cst_32 : f32 to vector<8x1xf32>
    %80 = arith.divf %78, %79 : vector<8x1xf32>
    %cst_33 = arith.constant 9.99999974E-6 : f32
    %81 = vector.broadcast %cst_33 : f32 to vector<8x1xf32>
    %82 = arith.addf %80, %81 : vector<8x1xf32>
    %83 = math.rsqrt %82 : vector<8x1xf32>
    %84 = vector.broadcast %83 : vector<8x1xf32> to vector<8x32xf32>
    %85 = arith.mulf %75, %84 : vector<8x32xf32>
    %86 = vector.broadcast %10 : vector<1x32xf32> to vector<8x32xf32>
    %87 = arith.mulf %85, %86 : vector<8x32xf32>
    %88 = vector.broadcast %11 : vector<1x32xf32> to vector<8x32xf32>
    %89 = arith.addf %87, %88 : vector<8x32xf32>
    %c0_34 = arith.constant 0 : index
    %c0_35 = arith.constant 0 : index
    %90 = vector.load %arg9[%c0_34, %c0_35] : memref<8x32xf32, #tpu.memory_space<vmem>>, vector<8x32xf32>
    tpu.vector_store %arg9[%c0_34, %c0_35], %89 {strides = array<i32>} : memref<8x32xf32, #tpu.memory_space<vmem>>, vector<8x32xf32>,
    return
  }
  func.func @transform_0(%arg0: i32) -> (i32, i32) {
    %c0_i32 = arith.constant 0 : i32
    %c0_i32_0 = arith.constant 0 : i32
    return %arg0, %c0_i32 : i32, i32
  }
  func.func @transform_1(%arg0: i32) -> (i32, i32) {
    %c0_i32 = arith.constant 0 : i32
    %c0_i32_0 = arith.constant 0 : i32
    %c0_i32_1 = arith.constant 0 : i32
    return %c0_i32, %c0_i32_0 : i32, i32
  }
  func.func @transform_2(%arg0: i32) -> (i32, i32) {
    %c0_i32 = arith.constant 0 : i32
    %c0_i32_0 = arith.constant 0 : i32
    %c0_i32_1 = arith.constant 0 : i32
    return %c0_i32, %c0_i32_0 : i32, i32
  }
  func.func @transform_3(%arg0: i32) -> (i32, i32) {
    %c0_i32 = arith.constant 0 : i32
    %c0_i32_0 = arith.constant 0 : i32
    %c0_i32_1 = arith.constant 0 : i32
    return %c0_i32, %c0_i32_0 : i32, i32
  }
  func.func @transform_4(%arg0: i32) -> (i32, i32) {
    %c0_i32 = arith.constant 0 : i32
    %c0_i32_0 = arith.constant 0 : i32
    %c0_i32_1 = arith.constant 0 : i32
    return %c0_i32, %c0_i32_0 : i32, i32
  }
  func.func @transform_5(%arg0: i32) -> (i32, i32) {
    %c0_i32 = arith.constant 0 : i32
    %c0_i32_0 = arith.constant 0 : i32
    %c0_i32_1 = arith.constant 0 : i32
    return %c0_i32, %c0_i32_0 : i32, i32
  }
  func.func @transform_6(%arg0: i32) -> (i32, i32) {
    %c0_i32 = arith.constant 0 : i32
    %c0_i32_0 = arith.constant 0 : i32
    %c0_i32_1 = arith.constant 0 : i32
    return %c0_i32, %c0_i32_0 : i32, i32
  }
  func.func @transform_7(%arg0: i32) -> (i32, i32) {
    %c0_i32 = arith.constant 0 : i32
    %c0_i32_0 = arith.constant 0 : i32
    %c0_i32_1 = arith.constant 0 : i32
    return %c0_i32, %c0_i32_0 : i32, i32
  }
  func.func @transform_8(%arg0: i32) -> (i32, i32) {
    %c0_i32 = arith.constant 0 : i32
    %c0_i32_0 = arith.constant 0 : i32
    return %arg0, %c0_i32 : i32, i32
  }
}

</mosaic_0001>

<llo_original>
// kernel: tpu_custom_call.1
$region0: #{tpu_custom_call.1}
  #allocation0 [shape = 'u32[]', space=smem, size = 0x4, offset = 0x4, fixed_abs, tag = 'smem constant byte address 0x4 - core index']
  #allocation1 [shape = 'u32[72,128]{1,0:T(1,128)}', space=vmem, size = 0x9000, scoped, tag = 'internal scratch']
  %s0 = inlined_call_operand.hbm [shape: f32[16,32], index: 0, kind: input, shape index: {}]
  %s1 = inlined_call_operand.vmem [shape: f32[32,96], index: 1, kind: input, shape index: {}]
  %s2 = inlined_call_operand.vmem [shape: f32[32,32], index: 2, kind: input, shape index: {}]
  %s3 = inlined_call_operand.vmem [shape: f32[32,64], index: 3, kind: input, shape index: {}]
  %s4 = inlined_call_operand.vmem [shape: f32[64,32], index: 4, kind: input, shape index: {}]
  %s5 = inlined_call_operand.hbm [shape: f32[8,128], index: 5, kind: input, shape index: {}]
  %s6 = inlined_call_operand.hbm [shape: f32[32,32], index: 6, kind: input, shape index: {}]
  %s7 = inlined_call_operand.hbm [shape: f32[32,32], index: 7, kind: input, shape index: {}]
  %s8 = inlined_call_operand.hbm [shape: f32[16,32], index: 8, kind: output, shape index: {}]
  %s9 = sld [smem:[#allocation0]]
  $region81: #{tpu_custom_call.1} parent=0
    _
  %s11 = ssub.s32 1, %s9
  %s12 = scalar_select 0, %s11, %s9
  $region1: #{tpu_custom_call.1} parent=0
    #allocation2 [shape = 'u8[8192]{0}', space=vmem, size = 0x2000, scoped, tag = 'input window, operand 0']
    #allocation3 [shape = 's32[2]{0}', space=sflag, size = 0x8, scoped, tag = 'scoped memory for tpu_custom_call.1']
    #allocation4 [shape = 's32[2]{0}', space=sflag, size = 0x8, scoped, tag = 'scoped memory for tpu_custom_call.1']
    #allocation5 [shape = 'u8[4096]{0}', space=vmem, size = 0x1000, scoped, tag = 'input window, operand 5, single buffered']
    #allocation6 [shape = 's32[1]{0}', space=sflag, size = 0x4, scoped, tag = 'scoped memory for tpu_custom_call.1']
    #allocation7 [shape = 'u8[16384]{0}', space=vmem, size = 0x4000, scoped, tag = 'input window, operand 6, single buffered']
    #allocation8 [shape = 'u8[16384]{0}', space=vmem, size = 0x4000, scoped, tag = 'input window, operand 7, single buffered']
    #allocation9 [shape = 's32[1]{0}', space=sflag, size = 0x4, scoped, tag = 'scoped memory for tpu_custom_call.1']
    #allocation10 [shape = 'u8[8192]{0}', space=vmem, size = 0x2000, scoped, tag = 'output window, operand 0']
    %13 = vsyncpa [#allocation3], 0
    %s14 = scalar_lea.sflag [#allocation3], 1
    %15 = vsyncpa %s14, 0
    %16 = vsyncpa [#allocation6], 0
    %17 = vsyncpa [#allocation9], 0
    %18 = vsyncpa [#allocation4], 0
    %s19 = scalar_lea.sflag [#allocation4], 1
    %20 = vsyncpa %s19, 0
    loop: start=0, step=1, limit=4
    $region2: #{tpu_custom_call.1} parent=1 // loop_pre_header
      _
    $region3: #{tpu_custom_call.1} parent=1 // loop_header
      %s22 = sphi 0, %s26
      %p23 = scmp.ge.s32.totalorder %s22, 4
      %s32 = sphi 0, %s34
      %s35 = sphi 0, %s32
      %s36 = sphi 0, %s35
      %s52 = sphi 0, %s36
      %s56 = sphi 0, %s56
      %s58 = sphi 0, %s56
      %s59 = sphi 0, %s58
      %s73 = sphi 0, %s59
      %s77 = sphi 0, %s77
      %s79 = sphi 0, %s77
      %s80 = sphi 0, %s79
      %s94 = sphi 0, %s80
      %s98 = sphi 0, %s98
      %s100 = sphi 0, %s98
      %s101 = sphi 0, %s100
      %s115 = sphi 0, %s101
      %s119 = sphi 0, %s119
      %s121 = sphi 0, %s119
      %s122 = sphi 0, %s121
      %s136 = sphi 0, %s122
      %s140 = sphi 0, %s140
      %s142 = sphi 0, %s140
      %s143 = sphi 0, %s142
      %s157 = sphi 0, %s143
      %s161 = sphi 0, %s161
      %s163 = sphi 0, %s161
      %s164 = sphi 0, %s163
      %s178 = sphi 0, %s164
      %s182 = sphi 0, %s182
      %s184 = sphi 0, %s182
      %s185 = sphi 0, %s184
      %s199 = sphi 0, %s185
      %s205 = sphi 0, %s207
      %s208 = sphi 0, %s205
      %s209 = sphi 0, %s208
      %s225 = sphi 0, %s209
    $region4: #{tpu_custom_call.1} parent=1 // loop_header_branch
      %25 = sbr.rel (%p23) target = $region8
    $region5: #{tpu_custom_call.1} parent=1 // loop_body
      %s27 = ssub.s32 %s22, 1
      %s28 = ssub.s32 %s22, 2
      %s29 = sadd.s32 %s22, 1
      %s30 = ssub.s32 %s22, %s29
      %p31 = scmp.eq.s32.totalorder %s30, 0
      %s33 = sadd.s32 %s32, 1
      %s34 = scalar_select %p31, %s32, %s33
      %p37 = pneg %p31
      %p38 = scmp.eq.s32.totalorder %s22, 1
      %p39 = por %p37, %p38
      %p40 = scmp.ne.s32.totalorder %s32, %s35
      %p41 = scmp.eq.s32.totalorder %s22, 0
      %p42 = por %p40, %p41
      %p43 = scmp.ne.s32.totalorder %s32, %s35
      %p44 = scmp.eq.s32.totalorder %s27, 1
      %p45 = por %p43, %p44
      %p46 = scmp.ne.s32.totalorder %s35, %s36
      %p47 = scmp.eq.s32.totalorder %s27, 0
      %p48 = por %p46, %p47
      %p49 = scmp.ne.s32.totalorder %s35, %s36
      %p50 = scmp.eq.s32.totalorder %s28, 1
      %p51 = por %p49, %p50
      %p53 = scmp.ne.s32.totalorder %s36, %s52
      %p54 = scmp.eq.s32.totalorder %s28, 0
      %p55 = por %p53, %p54
      %s57 = sadd.s32 %s56, 1
      %p60 = scmp.eq.s32.totalorder %s22, 1
      %p61 = scmp.ne.s32.totalorder %s56, %s58
      %p62 = scmp.eq.s32.totalorder %s22, 0
      %p63 = por %p61, %p62
      %p64 = scmp.ne.s32.totalorder %s56, %s58
      %p65 = scmp.eq.s32.totalorder %s27, 1
      %p66 = por %p64, %p65
      %p67 = scmp.ne.s32.totalorder %s58, %s59
      %p68 = scmp.eq.s32.totalorder %s27, 0
      %p69 = por %p67, %p68
      %p70 = scmp.ne.s32.totalorder %s58, %s59
      %p71 = scmp.eq.s32.totalorder %s28, 1
      %p72 = por %p70, %p71
      %p74 = scmp.ne.s32.totalorder %s59, %s73
      %p75 = scmp.eq.s32.totalorder %s28, 0
      %p76 = por %p74, %p75
      %s78 = sadd.s32 %s77, 1
      %p81 = scmp.eq.s32.totalorder %s22, 1
      %p82 = scmp.ne.s32.totalorder %s77, %s79
      %p83 = scmp.eq.s32.totalorder %s22, 0
      %p84 = por %p82, %p83
      %p85 = scmp.ne.s32.totalorder %s77, %s79
      %p86 = scmp.eq.s32.totalorder %s27, 1
      %p87 = por %p85, %p86
      %p88 = scmp.ne.s32.totalorder %s79, %s80
      %p89 = scmp.eq.s32.totalorder %s27, 0
      %p90 = por %p88, %p89
      %p91 = scmp.ne.s32.totalorder %s79, %s80
      %p92 = scmp.eq.s32.totalorder %s28, 1
      %p93 = por %p91, %p92
      %p95 = scmp.ne.s32.totalorder %s80, %s94
      %p96 = scmp.eq.s32.totalorder %s28, 0
      %p97 = por %p95, %p96
      %s99 = sadd.s32 %s98, 1
      %p102 = scmp.eq.s32.totalorder %s22, 1
      %p103 = scmp.ne.s32.totalorder %s98, %s100
      %p104 = scmp.eq.s32.totalorder %s22, 0
      %p105 = por %p103, %p104
      %p106 = scmp.ne.s32.totalorder %s98, %s100
      %p107 = scmp.eq.s32.totalorder %s27, 1
      %p108 = por %p106, %p107
      %p109 = scmp.ne.s32.totalorder %s100, %s101
      %p110 = scmp.eq.s32.totalorder %s27, 0
      %p111 = por %p109, %p110
      %p112 = scmp.ne.s32.totalorder %s100, %s101
      %p113 = scmp.eq.s32.totalorder %s28, 1
      %p114 = por %p112, %p113
      %p116 = scmp.ne.s32.totalorder %s101, %s115
      %p117 = scmp.eq.s32.totalorder %s28, 0
      %p118 = por %p116, %p117
      %s120 = sadd.s32 %s119, 1
      %p123 = scmp.eq.s32.totalorder %s22, 1
      %p124 = scmp.ne.s32.totalorder %s119, %s121
      %p125 = scmp.eq.s32.totalorder %s22, 0
      %p126 = por %p124, %p125
      %p127 = scmp.ne.s32.totalorder %s119, %s121
      %p128 = scmp.eq.s32.totalorder %s27, 1
      %p129 = por %p127, %p128
      %p130 = scmp.ne.s32.totalorder %s121, %s122
      %p131 = scmp.eq.s32.totalorder %s27, 0
      %p132 = por %p130, %p131
      %p133 = scmp.ne.s32.totalorder %s121, %s122
      %p134 = scmp.eq.s32.totalorder %s28, 1
      %p135 = por %p133, %p134
      %p137 = scmp.ne.s32.totalorder %s122, %s136
      %p138 = scmp.eq.s32.totalorder %s28, 0
      %p139 = por %p137, %p138
      %s141 = sadd.s32 %s140, 1
      %p144 = scmp.eq.s32.totalorder %s22, 1
      %p145 = scmp.ne.s32.totalorder %s140, %s142
      %p146 = scmp.eq.s32.totalorder %s22, 0
      %p147 = por %p145, %p146
      %p148 = scmp.ne.s32.totalorder %s140, %s142
      %p149 = scmp.eq.s32.totalorder %s27, 1
      %p150 = por %p148, %p149
      %p151 = scmp.ne.s32.totalorder %s142, %s143
      %p152 = scmp.eq.s32.totalorder %s27, 0
      %p153 = por %p151, %p152
      %p154 = scmp.ne.s32.totalorder %s142, %s143
      %p155 = scmp.eq.s32.totalorder %s28, 1
      %p156 = por %p154, %p155
      %p158 = scmp.ne.s32.totalorder %s143, %s157
      %p159 = scmp.eq.s32.totalorder %s28, 0
      %p160 = por %p158, %p159
      %s162 = sadd.s32 %s161, 1
      %p165 = scmp.eq.s32.totalorder %s22, 1
      %p166 = scmp.ne.s32.totalorder %s161, %s163
      %p167 = scmp.eq.s32.totalorder %s22, 0
      %p168 = por %p166, %p167
      %p169 = scmp.ne.s32.totalorder %s161, %s163
      %p170 = scmp.eq.s32.totalorder %s27, 1
      %p171 = por %p169, %p170
      %p172 = scmp.ne.s32.totalorder %s163, %s164
      %p173 = scmp.eq.s32.totalorder %s27, 0
      %p174 = por %p172, %p173
      %p175 = scmp.ne.s32.totalorder %s163, %s164
      %p176 = scmp.eq.s32.totalorder %s28, 1
      %p177 = por %p175, %p176
      %p179 = scmp.ne.s32.totalorder %s164, %s178
      %p180 = scmp.eq.s32.totalorder %s28, 0
      %p181 = por %p179, %p180
      %s183 = sadd.s32 %s182, 1
      %p186 = scmp.eq.s32.totalorder %s22, 1
      %p187 = scmp.ne.s32.totalorder %s182, %s184
      %p188 = scmp.eq.s32.totalorder %s22, 0
      %p189 = por %p187, %p188
      %p190 = scmp.ne.s32.totalorder %s182, %s184
      %p191 = scmp.eq.s32.totalorder %s27, 1
      %p192 = por %p190, %p191
      %p193 = scmp.ne.s32.totalorder %s184, %s185
      %p194 = scmp.eq.s32.totalorder %s27, 0
      %p195 = por %p193, %p194
      %p196 = scmp.ne.s32.totalorder %s184, %s185
      %p197 = scmp.eq.s32.totalorder %s28, 1
      %p198 = por %p196, %p197
      %p200 = scmp.ne.s32.totalorder %s185, %s199
      %p201 = scmp.eq.s32.totalorder %s28, 0
      %p202 = por %p200, %p201
      %s203 = ssub.s32 %s22, %s29
      %p204 = scmp.eq.s32.totalorder %s203, 0
      %s206 = sadd.s32 %s205, 1
      %s207 = scalar_select %p204, %s205, %s206
      %p210 = pneg %p204
      %p211 = scmp.eq.s32.totalorder %s22, 1
      %p212 = por %p210, %p211
      %p213 = scmp.ne.s32.totalorder %s205, %s208
      %p214 = scmp.eq.s32.totalorder %s22, 0
      %p215 = por %p213, %p214
      %p216 = scmp.ne.s32.totalorder %s205, %s208
      %p217 = scmp.eq.s32.totalorder %s27, 1
      %p218 = por %p216, %p217
      %p219 = scmp.ne.s32.totalorder %s208, %s209
      %p220 = scmp.eq.s32.totalorder %s27, 0
      %p221 = por %p219, %p220
      %p222 = scmp.ne.s32.totalorder %s208, %s209
      %p223 = scmp.eq.s32.totalorder %s28, 1
      %p224 = por %p222, %p223
      %p226 = scmp.ne.s32.totalorder %s209, %s225
      %p227 = scmp.eq.s32.totalorder %s28, 0
      %p228 = por %p226, %p227
      %p229 = scmp.le.s32.totalorder 1, %s22
      %p230 = scmp.lt.s32.totalorder %s22, 3
      %p231 = pnand %p229, %p230
      %p232 = pneg %p231
      // Predicated region
      $region9: #{tpu_custom_call.1} parent=5 // pred_check
        _
      $region10: #{tpu_custom_call.1} parent=5 // pred_check_branch
        %234 = sbr.rel (%p231) target = $region12
      $region11: #{tpu_custom_call.1} parent=5 // pred_region
        %s235 = ssub.s32 %s22, 1
        // Predicated region
        $region13: #{tpu_custom_call.1} parent=11 // pred_check
          %p236 = pneg %p69
        $region14: #{tpu_custom_call.1} parent=11 // pred_check_branch
          %238 = sbr.rel (%p236) target = $region16
        $region15: #{tpu_custom_call.1} parent=11 // pred_region
          _
        $region16: #{tpu_custom_call.1} parent=11 // pred_fallthru
          _
        // Predicated region
        $region17: #{tpu_custom_call.1} parent=11 // pred_check
          %p239 = pneg %p90
        $region18: #{tpu_custom_call.1} parent=11 // pred_check_branch
          %241 = sbr.rel (%p239) target = $region20
        $region19: #{tpu_custom_call.1} parent=11 // pred_region
          _
        $region20: #{tpu_custom_call.1} parent=11 // pred_fallthru
          _
        // Predicated region
        $region21: #{tpu_custom_call.1} parent=11 // pred_check
          %p242 = pneg %p111
        $region22: #{tpu_custom_call.1} parent=11 // pred_check_branch
          %244 = sbr.rel (%p242) target = $region24
        $region23: #{tpu_custom_call.1} parent=11 // pred_region
          _
        $region24: #{tpu_custom_call.1} parent=11 // pred_fallthru
          _
        // Predicated region
        $region25: #{tpu_custom_call.1} parent=11 // pred_check
          %p245 = pneg %p132
        $region26: #{tpu_custom_call.1} parent=11 // pred_check_branch
          %247 = sbr.rel (%p245) target = $region28
        $region27: #{tpu_custom_call.1} parent=11 // pred_region
          _
        $region28: #{tpu_custom_call.1} parent=11 // pred_fallthru
          _
        // Predicated region
        $region29: #{tpu_custom_call.1} parent=11 // pred_check
          %p248 = pneg %p153
        $region30: #{tpu_custom_call.1} parent=11 // pred_check_branch
          %250 = sbr.rel (%p248) target = $region32
        $region31: #{tpu_custom_call.1} parent=11 // pred_region
          %252 = vsyncadd [#allocation6], 0
          %s254 = sshll.u32 %s5, 4
          %s255 = int_to_ptr.hbm [resolvable:$true] %s254
          %s256 = sshll.u32 [#allocation5], 4
          %s257 = int_to_ptr.vmem [resolvable:$true] %s256
          %259 = dma.hbm_to_vmem [thread:$0]  %s255, 128, %s257, [#allocation6]
        $region32: #{tpu_custom_call.1} parent=11 // pred_fallthru
          _
        // Predicated region
        $region33: #{tpu_custom_call.1} parent=11 // pred_check
          %p260 = pneg %p174
        $region34: #{tpu_custom_call.1} parent=11 // pred_check_branch
          %262 = sbr.rel (%p260) target = $region36
        $region35: #{tpu_custom_call.1} parent=11 // pred_region
          %264 = vsyncadd [#allocation6], 0
          %s265 = sshll.u32 %s6, 4
          %s266 = int_to_ptr.hbm [resolvable:$true] %s265
          %s267 = sshll.u32 [#allocation7], 4
          %s268 = int_to_ptr.vmem [resolvable:$true] %s267
          %273 = dma.hbm_to_vmem [thread:$0]  %s266, 512, %s268, [#allocation6], 128, 128, 8
        $region36: #{tpu_custom_call.1} parent=11 // pred_fallthru
          _
        // Predicated region
        $region37: #{tpu_custom_call.1} parent=11 // pred_check
          %p274 = pneg %p195
        $region38: #{tpu_custom_call.1} parent=11 // pred_check_branch
          %276 = sbr.rel (%p274) target = $region40
        $region39: #{tpu_custom_call.1} parent=11 // pred_region
          %278 = vsyncadd [#allocation9], 0
          %s279 = sshll.u32 %s7, 4
          %s280 = int_to_ptr.hbm [resolvable:$true] %s279
          %s281 = sshll.u32 [#allocation8], 4
          %s282 = int_to_ptr.vmem [resolvable:$true] %s281
          %287 = dma.hbm_to_vmem [thread:$0]  %s280, 512, %s282, [#allocation9], 128, 128, 8
        $region40: #{tpu_custom_call.1} parent=11 // pred_fallthru
          _
      $region12: #{tpu_custom_call.1} parent=5 // pred_fallthru
        _
      %p288 = scmp.lt.s32.totalorder %s22, 2
      // Predicated region
      $region41: #{tpu_custom_call.1} parent=5 // pred_check
        %p289 = pneg %p288
      $region42: #{tpu_custom_call.1} parent=5 // pred_check_branch
        %291 = sbr.rel (%p289) target = $region44
      $region43: #{tpu_custom_call.1} parent=5 // pred_region
        // Predicated region
        $region45: #{tpu_custom_call.1} parent=43 // pred_check
          %p292 = pneg %p42
        $region46: #{tpu_custom_call.1} parent=43 // pred_check_branch
          %294 = sbr.rel (%p292) target = $region48
        $region47: #{tpu_custom_call.1} parent=43 // pred_region
          %s295 = sand.u32 %s32, 1
          %s296 = scalar_lea.sflag [#allocation3], %s295
          %s297 = sand.u32 %s32, 1
          %s298 = smul.addr %s297, 8
          %s299 = scalar_lea.vmem [#allocation2], %s298
          %301 = vsyncadd %s296, 0
          %s302 = smul.addr %s22, 8
          %s303 = scalar_lea.hbm %s0, %s302
          %s305 = sshll.u32 %s303, 4
          %s306 = int_to_ptr.hbm [resolvable:$true] %s305
          %s307 = sshll.u32 %s299, 4
          %s308 = int_to_ptr.vmem [resolvable:$true] %s307
          %310 = dma.hbm_to_vmem [thread:$0]  %s306, 128, %s308, %s296
        $region48: #{tpu_custom_call.1} parent=43 // pred_fallthru
          _
      $region44: #{tpu_custom_call.1} parent=5 // pred_fallthru
        _
      %p311 = scmp.le.s32.totalorder 1, %s22
      %p312 = scmp.lt.s32.totalorder %s22, 3
      %p313 = pnand %p311, %p312
      %p314 = pneg %p313
      // Predicated region
      $region49: #{tpu_custom_call.1} parent=5 // pred_check
        _
      $region50: #{tpu_custom_call.1} parent=5 // pred_check_branch
        %316 = sbr.rel (%p313) target = $region52
      $region51: #{tpu_custom_call.1} parent=5 // pred_region
        %s317 = ssub.s32 %s22, 1
        %s318 = sand.u32 %s35, 1
        %s319 = scalar_lea.sflag [#allocation3], %s318
        %s320 = sand.u32 %s35, 1
        %s321 = smul.addr %s320, 8
        %s322 = scalar_lea.vmem [#allocation2], %s321
        // Predicated region
        $region53: #{tpu_custom_call.1} parent=51 // pred_check
          %p323 = pneg %p48
        $region54: #{tpu_custom_call.1} parent=51 // pred_check_branch
          %325 = sbr.rel (%p323) target = $region56
        $region55: #{tpu_custom_call.1} parent=51 // pred_region
          %327 = dma.done %s319, 128
        $region56: #{tpu_custom_call.1} parent=51 // pred_fallthru
          _
        // Predicated region
        $region57: #{tpu_custom_call.1} parent=51 // pred_check
          %p328 = pneg %p153
        $region58: #{tpu_custom_call.1} parent=51 // pred_check_branch
          %330 = sbr.rel (%p328) target = $region60
        $region59: #{tpu_custom_call.1} parent=51 // pred_region
          %332 = dma.done [#allocation6], 128
        $region60: #{tpu_custom_call.1} parent=51 // pred_fallthru
          _
        // Predicated region
        $region61: #{tpu_custom_call.1} parent=51 // pred_check
          %p333 = pneg %p174
        $region62: #{tpu_custom_call.1} parent=51 // pred_check_branch
          %335 = sbr.rel (%p333) target = $region64
        $region63: #{tpu_custom_call.1} parent=51 // pred_region
          %337 = dma.done [#allocation6], 512
        $region64: #{tpu_custom_call.1} parent=51 // pred_fallthru
          _
        // Predicated region
        $region65: #{tpu_custom_call.1} parent=51 // pred_check
          %p338 = pneg %p195
        $region66: #{tpu_custom_call.1} parent=51 // pred_check_branch
          %340 = sbr.rel (%p338) target = $region68
        $region67: #{tpu_custom_call.1} parent=51 // pred_region
          %342 = dma.done [#allocation9], 512
        $region68: #{tpu_custom_call.1} parent=51 // pred_fallthru
          _
        %s343 = sand.u32 %s35, 1
        %s344 = scalar_lea.sflag [#allocation3], %s343
        %s345 = sand.u32 %s35, 1
        %s346 = smul.addr %s345, 8
        %s347 = scalar_lea.vmem [#allocation2], %s346
        %p348 = pneg %p48
        %p349 = pneg %p45
        %p350 = pneg %p69
        %p351 = pneg %p66
        %p352 = pneg %p90
        %p353 = pneg %p87
        %p354 = pneg %p111
        %p355 = pneg %p108
        %p356 = pneg %p132
        %p357 = pneg %p129
        %p358 = pneg %p153
        %p359 = pneg %p150
        %p360 = pneg %p174
        %p361 = pneg %p171
        %p362 = pneg %p195
        %p363 = pneg %p192
        %p364 = pneg %p221
        %p365 = pneg %p218
        %s366 = sand.u32 %s208, 1
        %s367 = scalar_lea.sflag [#allocation4], %s366
        %s368 = sand.u32 %s208, 1
        %s369 = smul.addr %s368, 8
        %s370 = scalar_lea.vmem [#allocation10], %s369
        %v371 = vld [vmem:[%s322] sm:$0xff]
        %v372 = vld [vmem:[#allocation5] sm:$0xff]
        %v373 = vld [vmem:[#allocation7] sm:$0xff]
        %v374 = vld [vmem:[#allocation7 + $0x8] sm:$0xff]
        %v375 = vld [vmem:[#allocation7 + $0x10] sm:$0xff]
        %v376 = vld [vmem:[#allocation7 + $0x18] sm:$0xff]
        %v377 = vld [vmem:[#allocation8] sm:$0xff]
        %v378 = vld [vmem:[#allocation8 + $0x8] sm:$0xff]
        %v379 = vld [vmem:[#allocation8 + $0x10] sm:$0xff]
        %v380 = vld [vmem:[#allocation8 + $0x18] sm:$0xff]
        %v381 = vld [vmem:[%s1] sm:$0xff]
        %v382 = vld [vmem:[%s1 + $0x8] sm:$0xff]
        %v383 = vld [vmem:[%s1 + $0x10] sm:$0xff]
        %v384 = vld [vmem:[%s1 + $0x18] sm:$0xff]
        %v385 = vperm.slane %v372, 0
        %vm386 = vcmask 261120
        %v388 = vsel %vm386, %v371, 0
        %390 = vmatpush.msra.mxu0 0.0
        %391 = vmatpush.msra.mxu0 0.0
        %392 = vmatpush.msra.mxu0 0.0
        %393 = vmatpush.msra.mxu0 0.0
        %394 = vmatpush.msra.mxu0 0.0
        %395 = vmatpush.msra.mxu0 0.0
        %396 = vmatpush.msra.mxu0 0.0
        %397 = vmatpush.msra.mxu0 0.0
        %398 = vmatpush.msra.mxu0 0.0
        %399 = vmatpush.msra.mxu0 0.0
        %400 = vmatpush.msra.mxu0 0.0
        %401 = vmatpush.msra.mxu0 0.0
        %402 = vmatpush.msra.mxu0 %v384
        %403 = vmatpush.msra.mxu0 %v383
        %404 = vmatpush.msra.mxu0 %v382
        %405 = vmatpush.msra.mxu0 %v381
        %406 = vmatmul.f32.gmra.mxu0 %v388
        %v407 = vpop.f32.mrf.mxu0
        %v408 = vadd.f32 %v385, %v407
        %409 = vdwg.mxu0
        %414 = vrot.lane.b32.xlu0 %v373, 32
        %v415 = vpop.permute.xlu0 %414
        %416 = vrot.lane.b32.xlu0 %v374, 32
        %v417 = vpop.permute.xlu0 %416
        %418 = vrot.lane.b32.xlu0 %v375, 32
        %v419 = vpop.permute.xlu0 %418
        %420 = vrot.lane.b32.xlu0 %v376, 32
        %v421 = vpop.permute.xlu0 %420
        %v426 = vmul.f32 %v408, %v415
        %v427 = vmul.f32 %v408, %v417
        %v428 = vmul.f32 %v408, %v419
        %v429 = vmul.f32 %v408, %v421
        %430 = vrot.lane.b32.xlu0 %v373, 64
        %v431 = vpop.permute.xlu0 %430
        %432 = vrot.lane.b32.xlu0 %v374, 64
        %v433 = vpop.permute.xlu0 %432
        %434 = vrot.lane.b32.xlu0 %v375, 64
        %v435 = vpop.permute.xlu0 %434
        %436 = vrot.lane.b32.xlu0 %v376, 64
        %v437 = vpop.permute.xlu0 %436
        %v442 = vmul.f32 %v408, %v431
        %v443 = vmul.f32 %v408, %v433
        %v444 = vmul.f32 %v408, %v435
        %v445 = vmul.f32 %v408, %v437
        %450 = vrot.lane.b32.xlu0 %v426, 96
        %v451 = vpop.permute.xlu0 %450
        %452 = vrot.lane.b32.xlu0 %v427, 96
        %v453 = vpop.permute.xlu0 %452
        %454 = vrot.lane.b32.xlu0 %v428, 96
        %v455 = vpop.permute.xlu0 %454
        %456 = vrot.lane.b32.xlu0 %v429, 96
        %v457 = vpop.permute.xlu0 %456
        %v459 = vsel %vm386, %v408, 0
        %v461 = vsel %vm386, %v451, 0
        %v463 = vsel %vm386, %v453, 0
        %v465 = vsel %vm386, %v455, 0
        %v467 = vsel %vm386, %v457, 0
        %469 = vmatpush.xpose.msra.mxu0 0.0
        %470 = vmatpush.xpose.msra.mxu0 0.0
        %471 = vmatpush.xpose.msra.mxu0 0.0
        %472 = vmatpush.xpose.msra.mxu0 0.0
        %473 = vmatpush.xpose.msra.mxu0 0.0
        %474 = vmatpush.xpose.msra.mxu0 0.0
        %475 = vmatpush.xpose.msra.mxu0 0.0
        %476 = vmatpush.xpose.msra.mxu0 0.0
        %477 = vmatpush.xpose.msra.mxu0 0.0
        %478 = vmatpush.xpose.msra.mxu0 0.0
        %479 = vmatpush.xpose.msra.mxu0 0.0
        %480 = vmatpush.xpose.msra.mxu0 0.0
        %481 = vmatpush.xpose.msra.mxu0 %v467
        %482 = vmatpush.xpose.msra.mxu0 %v465
        %483 = vmatpush.xpose.msra.mxu0 %v463
        %484 = vmatpush.xpose.msra.mxu0 %v461
        %485 = vmatmul.f32.gmra.mxu0 %v459
        %v486 = vpop.f32.mrf.mxu0
        %v487 = vadd.f32 0.0, %v486
        %488 = vdwg.mxu0
        %v489 = vmul.f32 %v487, 0.35355338
        %v490 = vsel %vm386, %v489, -inf
        %491 = vmax.xlane.f32.xlu0 %v490
        %v492 = vpop.xlane.xlu0 %491
        %v493 = vsub.f32 %v489, %v492
        %v494 = vmul.f32 %v493, 1.442695
        %v495 = vpow.pop %v494
        %v497 = vsel %vm386, %v495, 0
        %499 = vmatpush.msra.mxu0 0.0
        %500 = vmatpush.msra.mxu0 0.0
        %501 = vmatpush.msra.mxu0 0.0
        %502 = vmatpush.msra.mxu0 0.0
        %503 = vmatpush.msra.mxu0 0.0
        %504 = vmatpush.msra.mxu0 0.0
        %505 = vmatpush.msra.mxu0 0.0
        %506 = vmatpush.msra.mxu0 0.0
        %507 = vmatpush.msra.mxu0 0.0
        %508 = vmatpush.msra.mxu0 0.0
        %509 = vmatpush.msra.mxu0 0.0
        %510 = vmatpush.msra.mxu0 0.0
        %511 = vmatpush.msra.mxu0 %v380
        %512 = vmatpush.msra.mxu0 %v379
        %513 = vmatpush.msra.mxu0 %v378
        %514 = vmatpush.msra.mxu0 %v377
        %515 = vmatmul.f32.gmra.mxu0 %v497
        %v516 = vpop.f32.mrf.mxu0
        %v517 = vadd.f32 0.0, %v516
        %518 = vdwg.mxu0
        %v519 = vrcp.pop %v517
        %v520 = vmul.f32 %v517, %v519
        %v521 = vsub.f32 1.0, %v520
        %v522 = vmul.f32 %v519, %v521
        %v523 = vadd.f32 %v519, %v522
        %vm524 = vweird.f32 %v517
        %vm525 = vweird.f32 %v519
        %vm526 = vmor %vm524, %vm525
        %v527 = vsel %vm526, %v519, %v523
        %v528 = vand.u32 2147483647, %v517
        %vm529 = vcmp.eq.f32.partialorder %v528, 8.507059e+37
        %v530 = vand.u32 %v517, 2147483648
        %v531 = vor.u32 1.1754944e-38, %v530
        %v532 = vsel %vm529, %v531, %v527
        %v533 = vmul.f32 %v495, %v532
        %538 = vrot.lane.b32.xlu0 %v442, 64
        %v539 = vpop.permute.xlu0 %538
        %540 = vrot.lane.b32.xlu0 %v443, 64
        %v541 = vpop.permute.xlu0 %540
        %542 = vrot.lane.b32.xlu0 %v444, 64
        %v543 = vpop.permute.xlu0 %542
        %544 = vrot.lane.b32.xlu0 %v445, 64
        %v545 = vpop.permute.xlu0 %544
        %v551 = vsel %vm386, %v533, 0
        %553 = vmatpush.msra.mxu0 0.0
        %554 = vmatpush.msra.mxu0 0.0
        %555 = vmatpush.msra.mxu0 0.0
        %556 = vmatpush.msra.mxu0 0.0
        %557 = vmatpush.msra.mxu0 0.0
        %558 = vmatpush.msra.mxu0 0.0
        %559 = vmatpush.msra.mxu0 0.0
        %560 = vmatpush.msra.mxu0 0.0
        %561 = vmatpush.msra.mxu0 0.0
        %562 = vmatpush.msra.mxu0 0.0
        %563 = vmatpush.msra.mxu0 0.0
        %564 = vmatpush.msra.mxu0 0.0
        %565 = vmatpush.msra.mxu0 %v545
        %566 = vmatpush.msra.mxu0 %v543
        %567 = vmatpush.msra.mxu0 %v541
        %568 = vmatpush.msra.mxu0 %v539
        %569 = vmatmul.f32.gmra.mxu0 %v551
        %v570 = vpop.f32.mrf.mxu0
        %v571 = vadd.f32 0.0, %v570
        %572 = vdwg.mxu0
        %v573 = vld [vmem:[%s2] sm:$0xff]
        %v574 = vld [vmem:[%s2 + $0x8] sm:$0xff]
        %v575 = vld [vmem:[%s2 + $0x10] sm:$0xff]
        %v576 = vld [vmem:[%s2 + $0x18] sm:$0xff]
        %v577 = vperm.slane %v372, 2
        %v579 = vsel %vm386, %v571, 0
        %581 = vmatpush.msra.mxu0 0.0
        %582 = vmatpush.msra.mxu0 0.0
        %583 = vmatpush.msra.mxu0 0.0
        %584 = vmatpush.msra.mxu0 0.0
        %585 = vmatpush.msra.mxu0 0.0
        %586 = vmatpush.msra.mxu0 0.0
        %587 = vmatpush.msra.mxu0 0.0
        %588 = vmatpush.msra.mxu0 0.0
        %589 = vmatpush.msra.mxu0 0.0
        %590 = vmatpush.msra.mxu0 0.0
        %591 = vmatpush.msra.mxu0 0.0
        %592 = vmatpush.msra.mxu0 0.0
        %593 = vmatpush.msra.mxu0 %v576
        %594 = vmatpush.msra.mxu0 %v575
        %595 = vmatpush.msra.mxu0 %v574
        %596 = vmatpush.msra.mxu0 %v573
        %597 = vmatmul.f32.gmra.mxu0 %v579
        %v598 = vpop.f32.mrf.mxu0
        %v599 = vadd.f32 %v577, %v598
        %600 = vdwg.mxu0
        %v601 = vadd.f32 %v371, %v599
        %v602 = vsel %vm386, %v601, 0.0
        %603 = vadd.xlane.f32.xlu0 %v602
        %v604 = vpop.xlane.xlu0 %603
        %v605 = vrcp.pop 32.0
        %v606 = vmul.f32 32.0, %v605
        %v607 = vsub.f32 1.0, %v606
        %v608 = vmul.f32 %v605, %v607
        %v609 = vadd.f32 %v605, %v608
        %vm610 = vweird.f32 %v605
        %v611 = vsel %vm610, %v605, %v609
        %v612 = vmul.f32 %v604, %v611
        %v613 = vsub.f32 %v601, %v612
        %v614 = vmul.f32 %v613, %v613
        %v615 = vsel %vm386, %v614, 0.0
        %616 = vadd.xlane.f32.xlu0 %v615
        %v617 = vpop.xlane.xlu0 %616
        %v618 = vmul.f32 %v617, %v611
        %v619 = vadd.f32 %v618, 1e-05
        %v620 = vrsqrt.pop %v619
        %v621 = vmul.f32 %v620, %v619
        %v622 = vmul.f32 %v621, %v620
        %v623 = vmul.f32 0.5, %v622
        %v624 = vsub.f32 1.5, %v623
        %v625 = vmul.f32 %v620, %v624
        %vm626 = vweird.f32 %v619
        %vm627 = vweird.f32 %v620
        %vm628 = vmor %vm626, %vm627
        %v629 = vsel %vm628, %v620, %v625
        %v630 = vmul.f32 %v613, %v629
        %v631 = vperm.slane %v372, 4
        %v632 = vmul.f32 %v630, %v631
        %v633 = vperm.slane %v372, 5
        %v634 = vadd.f32 %v632, %v633
        %v635 = vld [vmem:[%s3] sm:$0xff]
        %v636 = vld [vmem:[%s3 + $0x8] sm:$0xff]
        %v637 = vld [vmem:[%s3 + $0x10] sm:$0xff]
        %v638 = vld [vmem:[%s3 + $0x18] sm:$0xff]
        %v639 = vperm.slane %v372, 1
        %v641 = vsel %vm386, %v634, 0
        %643 = vmatpush.msra.mxu0 0.0
        %644 = vmatpush.msra.mxu0 0.0
        %645 = vmatpush.msra.mxu0 0.0
        %646 = vmatpush.msra.mxu0 0.0
        %647 = vmatpush.msra.mxu0 0.0
        %648 = vmatpush.msra.mxu0 0.0
        %649 = vmatpush.msra.mxu0 0.0
        %650 = vmatpush.msra.mxu0 0.0
        %651 = vmatpush.msra.mxu0 0.0
        %652 = vmatpush.msra.mxu0 0.0
        %653 = vmatpush.msra.mxu0 0.0
        %654 = vmatpush.msra.mxu0 0.0
        %655 = vmatpush.msra.mxu0 %v638
        %656 = vmatpush.msra.mxu0 %v637
        %657 = vmatpush.msra.mxu0 %v636
        %658 = vmatpush.msra.mxu0 %v635
        %659 = vmatmul.f32.gmra.mxu0 %v641
        %v660 = vpop.f32.mrf.mxu0
        %v661 = vadd.f32 %v639, %v660
        %662 = vdwg.mxu0
        %v663 = vmax.f32 %v661, 0.0
        %v664 = vld [vmem:[%s4] sm:$0xff]
        %v665 = vld [vmem:[%s4 + $0x8] sm:$0xff]
        %v666 = vld [vmem:[%s4 + $0x10] sm:$0xff]
        %v667 = vld [vmem:[%s4 + $0x18] sm:$0xff]
        %v668 = vld [vmem:[%s4 + $0x20] sm:$0xff]
        %v669 = vld [vmem:[%s4 + $0x28] sm:$0xff]
        %v670 = vld [vmem:[%s4 + $0x30] sm:$0xff]
        %v671 = vld [vmem:[%s4 + $0x38] sm:$0xff]
        %v672 = vperm.slane %v372, 3
        %vm673 = vcmask 523264
        %v675 = vsel %vm673, %v663, 0
        %677 = vmatpush.msra.mxu0 0.0
        %678 = vmatpush.msra.mxu0 0.0
        %679 = vmatpush.msra.mxu0 0.0
        %680 = vmatpush.msra.mxu0 0.0
        %681 = vmatpush.msra.mxu0 0.0
        %682 = vmatpush.msra.mxu0 0.0
        %683 = vmatpush.msra.mxu0 0.0
        %684 = vmatpush.msra.mxu0 0.0
        %685 = vmatpush.msra.mxu0 %v671
        %686 = vmatpush.msra.mxu0 %v670
        %687 = vmatpush.msra.mxu0 %v669
        %688 = vmatpush.msra.mxu0 %v668
        %689 = vmatpush.msra.mxu0 %v667
        %690 = vmatpush.msra.mxu0 %v666
        %691 = vmatpush.msra.mxu0 %v665
        %692 = vmatpush.msra.mxu0 %v664
        %693 = vmatmul.f32.gmra.mxu0 %v675
        %v694 = vpop.f32.mrf.mxu0
        %v695 = vadd.f32 %v672, %v694
        %696 = vdwg.mxu0
        %v697 = vadd.f32 %v634, %v695
        %v698 = vsel %vm386, %v697, 0.0
        %699 = vadd.xlane.f32.xlu0 %v698
        %v700 = vpop.xlane.xlu0 %699
        %v701 = vmul.f32 %v700, %v611
        %v702 = vsub.f32 %v697, %v701
        %v703 = vmul.f32 %v702, %v702
        %v704 = vsel %vm386, %v703, 0.0
        %705 = vadd.xlane.f32.xlu0 %v704
        %v706 = vpop.xlane.xlu0 %705
        %v707 = vmul.f32 %v706, %v611
        %v708 = vadd.f32 %v707, 1e-05
        %v709 = vrsqrt.pop %v708
        %v710 = vmul.f32 %v709, %v708
        %v711 = vmul.f32 %v710, %v709
        %v712 = vmul.f32 0.5, %v711
        %v713 = vsub.f32 1.5, %v712
        %v714 = vmul.f32 %v709, %v713
        %vm715 = vweird.f32 %v708
        %vm716 = vweird.f32 %v709
        %vm717 = vmor %vm715, %vm716
        %v718 = vsel %vm717, %v709, %v714
        %v719 = vmul.f32 %v702, %v718
        %v720 = vperm.slane %v372, 6
        %v721 = vmul.f32 %v719, %v720
        %v722 = vperm.slane %v372, 7
        %v723 = vadd.f32 %v721, %v722
        %724 = vst.msk [vmem:[%s370] sm:$0xff] %vm386, %v723
        %s725 = sand.u32 %s208, 1
        %s726 = scalar_lea.sflag [#allocation4], %s725
        %s727 = sand.u32 %s208, 1
        %s728 = smul.addr %s727, 8
        %s729 = scalar_lea.vmem [#allocation10], %s728
        // Predicated region
        $region69: #{tpu_custom_call.1} parent=51 // pred_check
          %p730 = pneg %p218
        $region70: #{tpu_custom_call.1} parent=51 // pred_check_branch
          %732 = sbr.rel (%p730) target = $region72
        $region71: #{tpu_custom_call.1} parent=51 // pred_region
          %734 = vsyncadd %s726, 0
          %s735 = smul.addr %s27, 8
          %s736 = scalar_lea.hbm %s8, %s735
          %s738 = sshll.u32 %s729, 4
          %s739 = int_to_ptr.vmem [resolvable:$true] %s738
          %s740 = sshll.u32 %s736, 4
          %s741 = int_to_ptr.hbm [resolvable:$true] %s740
          %743 = dma.vmem_to_hbm [thread:$0]  %s739, 128, %s741, %s726
        $region72: #{tpu_custom_call.1} parent=51 // pred_fallthru
          _
      $region52: #{tpu_custom_call.1} parent=5 // pred_fallthru
        _
      %p744 = scmp.le.s32.totalorder 2, %s22
      // Predicated region
      $region73: #{tpu_custom_call.1} parent=5 // pred_check
        %p745 = pneg %p744
      $region74: #{tpu_custom_call.1} parent=5 // pred_check_branch
        %747 = sbr.rel (%p745) target = $region76
      $region75: #{tpu_custom_call.1} parent=5 // pred_region
        %s748 = ssub.s32 %s22, 2
        // Predicated region
        $region77: #{tpu_custom_call.1} parent=75 // pred_check
          %p749 = pneg %p224
        $region78: #{tpu_custom_call.1} parent=75 // pred_check_branch
          %751 = sbr.rel (%p749) target = $region80
        $region79: #{tpu_custom_call.1} parent=75 // pred_region
          %s752 = sand.u32 %s209, 1
          %s753 = scalar_lea.sflag [#allocation4], %s752
          %s754 = sand.u32 %s209, 1
          %s755 = smul.addr %s754, 8
          %s756 = scalar_lea.vmem [#allocation10], %s755
          %758 = dma.done %s753, 128
        $region80: #{tpu_custom_call.1} parent=75 // pred_fallthru
          _
      $region76: #{tpu_custom_call.1} parent=5 // pred_fallthru
        _
    $region6: #{tpu_custom_call.1} parent=1 // loop_footer
      %s26 = sadd.s32 1, %s22
    $region7: #{tpu_custom_call.1} parent=1 // loop_footer_branch
      %21 = sbr.rel target = $region3
    $region8: #{tpu_custom_call.1} parent=1 // loop_exit
      _
    %759 = vsyncpa [#allocation3], 1
    %s760 = scalar_lea.sflag [#allocation3], 1
    %761 = vsyncpa %s760, 1
    %762 = vsyncpa [#allocation6], 1
    %763 = vsyncpa [#allocation9], 1
    %764 = vsyncpa [#allocation4], 1
    %s765 = scalar_lea.sflag [#allocation4], 1
    %766 = vsyncpa %s765, 1

</llo_original>
